<compile_context>
chip_gen: v6e
topology: v6e:2x2x1
jax: 0.10.0
libtpu: 0.0.40
codegen_flags: <defaults>
</compile_context>

<pallas_src>
import functools

import jax
import jax.numpy as jnp
from jax.experimental import pallas as pl
from jax.experimental.pallas import tpu as pltpu


LANE = 128     # TPU lane width; action dim is padded to this for lane-dense stores.
HIDDEN = 128   # fixed by the PyTorch module.


def policy_net_kernel(x_ref, w1_ref, b1_ref, w2_ref, b2_ref, out_ref):
    # ---- hidden = relu(x @ W1 + b1) ----  bf16 MXU inputs, f32 accumulate.
    # x arrives as f32 and is cast here (free on the VPU; avoids a wrapper-side pass).
    x = x_ref[...].astype(jnp.bfloat16)
    h = jnp.dot(x, w1_ref[...], preferred_element_type=jnp.float32)
    h = jnp.maximum(h + b1_ref[...], 0.0)

    # ---- logits = h @ W2 + b2 ----  (W2/b2 padded to 128 lanes; padded bias = -1e30)
    logits = jnp.dot(h.astype(jnp.bfloat16), w2_ref[...],
                     preferred_element_type=jnp.float32) + b2_ref[...]

    # ---- softmax(dim=-1), numerically stable; padded columns underflow to exactly 0 ----
    m = jnp.max(logits, axis=-1, keepdims=True)
    e = jnp.exp(logits - m)
    denom = jnp.sum(e, axis=-1, keepdims=True)
    out_ref[...] = (e / denom).astype(out_ref.dtype)   # exact normalization


def prepare_params(w1, b1, w2, b2):
    """One-time parameter prep (hoisted out of the per-call path).

    Casts matmul weights to bf16 and pads the action dim to 128 lanes. Padded weight
    columns are zero and padded bias columns are -1e30, so exp() underflows to exactly 0
    there and the softmax over the real columns is unaffected.
    """
    S, H = w1.shape
    H2, A = w2.shape
    assert H == HIDDEN and H2 == HIDDEN
    assert A <= LANE, "action_dim must be <= 128 for the lane-dense padded head"
    w1_bf = w1.astype(jnp.bfloat16)
    b1_f = b1.astype(jnp.float32).reshape(1, H)
    w2_p = jnp.zeros((H, LANE), jnp.bfloat16).at[:, :A].set(w2.astype(jnp.bfloat16))
    b2_p = jnp.full((1, LANE), -1e30, jnp.float32).at[:, :A].set(
        b2.astype(jnp.float32).reshape(-1))
    return w1_bf, b1_f, w2_p, b2_p


@functools.partial(jax.jit, static_argnames=("action_dim", "max_tile"))
def policy_network_forward(x, w1_bf, b1, w2_p, b2_p, *, action_dim, max_tile=1024):
    """Fused MLP + softmax. x: (B, state_dim) f32 -> (B, action_dim) f32."""
    B, S = x.shape
    H = w1_bf.shape[1]

    # Tiling: fewest/largest grid steps, but aim for >=2 steps (one per TensorCore on
    # v7x under "parallel" semantics). Rows per tile must be a multiple of 8 (sublanes).
    B8 = ((B + 7) // 8) * 8
    tile_b = min(max_tile, ((pl.cdiv(B8, 2) + 7) // 8) * 8)
    tile_b = max(tile_b, 8)
    num_tiles = pl.cdiv(B8, tile_b)
    B_pad = num_tiles * tile_b
    if B_pad != B:
        x = jnp.pad(x, ((0, B_pad - B), (0, 0)))   # padded rows are zeros -> harmless

    # Advisory cost estimate so XLA can overlap this tiny call with surrounding ops.
    cost = pl.CostEstimate(
        flops=2 * B_pad * (S * H + H * LANE),
        transcendentals=B_pad * LANE,
        bytes_accessed=(B_pad * S * 4 + B_pad * LANE * 4
                        + S * H * 2 + H * 4 + H * LANE * 2 + LANE * 4),
    )

    out = pl.pallas_call(
        policy_net_kernel,
        out_shape=jax.ShapeDtypeStruct((B_pad, LANE), jnp.float32),
        grid=(num_tiles,),
        in_specs=[
            pl.BlockSpec((tile_b, S), lambda i: (i, 0)),     # x: tiled over batch
            pl.BlockSpec((S, H), lambda i: (0, 0)),          # W1: VMEM-resident
            pl.BlockSpec((1, H), lambda i: (0, 0)),          # b1: VMEM-resident
            pl.BlockSpec((H, LANE), lambda i: (0, 0)),       # W2 (padded): resident
            pl.BlockSpec((1, LANE), lambda i: (0, 0)),       # b2 (padded): resident
        ],
        out_specs=pl.BlockSpec((tile_b, LANE), lambda i: (i, 0)),
        compiler_params=pltpu.CompilerParams(
            dimension_semantics=("parallel",),  # v7x: shard batch tiles across 2 TCs
        ),
        cost_estimate=cost,
    )(x, w1_bf, b1, w2_p, b2_p)

    return out[:B, :action_dim]


def init_params(key, state_dim, hidden_dim, action_dim):
    """Deterministic init mimicking torch.nn.Linear default (uniform +/- 1/sqrt(fan_in))."""
    k1, k2, k3, k4 = jax.random.split(key, 4)
    lim1 = 1.0 / jnp.sqrt(jnp.float32(state_dim))
    lim2 = 1.0 / jnp.sqrt(jnp.float32(hidden_dim))
    # Stored as (in, out) so the kernel does x @ W.
    w1 = jax.random.uniform(k1, (state_dim, hidden_dim), jnp.float32, -lim1, lim1)
    b1 = jax.random.uniform(k2, (1, hidden_dim), jnp.float32, -lim1, lim1)
    w2 = jax.random.uniform(k3, (hidden_dim, action_dim), jnp.float32, -lim2, lim2)
    b2 = jax.random.uniform(k4, (1, action_dim), jnp.float32, -lim2, lim2)
    return w1, b1, w2, b2


if __name__ == "__main__":
    state_dim = 16
    hidden_dim = 128
    action_dim = 8
    batch = 64           # -> 2 grid steps of 32 rows (one per TensorCore on v7x)

    key = jax.random.PRNGKey(0)
    k_x, k_p = jax.random.split(key)

    x = jax.random.normal(k_x, (batch, state_dim), jnp.float32)
    w1, b1, w2, b2 = init_params(k_p, state_dim, hidden_dim, action_dim)

    # One-time parameter prep (bf16 casts + lane padding) — outside the hot path.
    w1_bf, b1_f, w2_p, b2_p = prepare_params(w1, b1, w2, b2)

    probs = policy_network_forward(x, w1_bf, b1_f, w2_p, b2_p, action_dim=action_dim)
    probs = jax.block_until_ready(probs)

    # Reference 1: plain JAX with the same bf16-input / f32-accumulate matmuls (tight check).
    h_ref = jnp.maximum(
        jnp.dot(x.astype(jnp.bfloat16), w1.astype(jnp.bfloat16),
                preferred_element_type=jnp.float32) + b1, 0.0)
    logits_ref = jnp.dot(h_ref.astype(jnp.bfloat16), w2.astype(jnp.bfloat16),
                         preferred_element_type=jnp.float32) + b2
    probs_ref_bf16 = jax.nn.softmax(logits_ref, axis=-1)

    # Reference 2: full-f32 math (loose check; bounds the bf16 quantization error).
    h_f32 = jnp.maximum(x @ w1 + b1, 0.0)
    probs_ref_f32 = jax.nn.softmax(h_f32 @ w2 + b2, axis=-1)

    assert probs.shape == (batch, action_dim)
    assert jnp.allclose(probs, probs_ref_bf16, atol=2e-3, rtol=5e-3)
    assert jnp.allclose(probs, probs_ref_f32, atol=3e-2, rtol=3e-2)
    assert jnp.allclose(jnp.sum(probs, axis=-1), 1.0, atol=1e-3)

    print("KERNEL_OK")
</pallas_src>

<mosaic_0001>
module attributes {stable_mosaic.version = 11 : i64} {
  func.func @policy_net_kernel(%arg0: i32, %arg1: memref<32x16xf32, #tpu.memory_space<vmem>>, %arg2: memref<16x128xbf16, #tpu.memory_space<vmem>>, %arg3: memref<1x128xf32, #tpu.memory_space<vmem>>, %arg4: memref<128x128xbf16, #tpu.memory_space<vmem>>, %arg5: memref<1x128xf32, #tpu.memory_space<vmem>>, %arg6: memref<32x128xf32, #tpu.memory_space<vmem>>) attributes {dimension_semantics = [#tpu.dimension_semantics<parallel>], iteration_bounds = array<i64: 2>, scalar_prefetch = 0 : i64, scratch_operands = 0 : i64, tpu.core_type = #tpu.core_type<tc>, window_params = [{transform_indices = @transform_0, window_bounds = array<i64: 32, 16>}, {pipeline_mode = #tpu.pipeline_mode<synchronous>, transform_indices = @transform_1, window_bounds = array<i64: 16, 128>}, {pipeline_mode = #tpu.pipeline_mode<synchronous>, transform_indices = @transform_2, window_bounds = array<i64: 1, 128>}, {pipeline_mode = #tpu.pipeline_mode<synchronous>, transform_indices = @transform_3, window_bounds = array<i64: 128, 128>}, {pipeline_mode = #tpu.pipeline_mode<synchronous>, transform_indices = @transform_4, window_bounds = array<i64: 1, 128>}, {transform_indices = @transform_5, window_bounds = array<i64: 32, 128>}]} {
    %c0 = arith.constant 0 : index
    %c0_0 = arith.constant 0 : index
    %0 = vector.load %arg1[%c0, %c0_0] : memref<32x16xf32, #tpu.memory_space<vmem>>, vector<32x16xf32>
    %1 = arith.truncf %0 : vector<32x16xf32> to vector<32x16xbf16>
    %c0_1 = arith.constant 0 : index
    %c0_2 = arith.constant 0 : index
    %2 = vector.load %arg2[%c0_1, %c0_2] : memref<16x128xbf16, #tpu.memory_space<vmem>>, vector<16x128xbf16>
    %cst = arith.constant dense<0.000000e+00> : vector<32x128xf32>
    %3 = tpu.matmul %1, %2, %cst {dimension_numbers = #tpu.dot_dimension_numbers<[1], [0], [0], [1], [0, 0, 1, 1], [], []>} : vector<32x16xbf16>, vector<16x128xbf16>, vector<32x128xf32> -> vector<32x128xf32>
    %c0_3 = arith.constant 0 : index
    %c0_4 = arith.constant 0 : index
    %4 = vector.load %arg3[%c0_3, %c0_4] : memref<1x128xf32, #tpu.memory_space<vmem>>, vector<1x128xf32>
    %5 = vector.broadcast %4 : vector<1x128xf32> to vector<32x128xf32>
    %6 = arith.addf %3, %5 : vector<32x128xf32>
    %cst_5 = arith.constant 0.000000e+00 : f32
    %7 = vector.broadcast %cst_5 : f32 to vector<32x128xf32>
    %8 = arith.maximumf %6, %7 : vector<32x128xf32>
    %9 = arith.truncf %8 : vector<32x128xf32> to vector<32x128xbf16>
    %c0_6 = arith.constant 0 : index
    %c0_7 = arith.constant 0 : index
    %10 = vector.load %arg4[%c0_6, %c0_7] : memref<128x128xbf16, #tpu.memory_space<vmem>>, vector<128x128xbf16>
    %cst_8 = arith.constant dense<0.000000e+00> : vector<32x128xf32>
    %11 = tpu.matmul %9, %10, %cst_8 {dimension_numbers = #tpu.dot_dimension_numbers<[1], [0], [0], [1], [0, 0, 1, 1], [], []>} : vector<32x128xbf16>, vector<128x128xbf16>, vector<32x128xf32> -> vector<32x128xf32>
    %c0_9 = arith.constant 0 : index
    %c0_10 = arith.constant 0 : index
    %12 = vector.load %arg5[%c0_9, %c0_10] : memref<1x128xf32, #tpu.memory_space<vmem>>, vector<1x128xf32>
    %13 = vector.broadcast %12 : vector<1x128xf32> to vector<32x128xf32>
    %14 = arith.addf %11, %13 : vector<32x128xf32>
    %cst_11 = arith.constant dense<0xFF800000> : vector<32xf32>
    %15 = vector.multi_reduction <maximumf>, %14, %cst_11 [1] : vector<32x128xf32> to vector<32xf32>
    %16 = vector.shape_cast %15 : vector<32xf32> to vector<32x1xf32>
    %17 = vector.broadcast %16 : vector<32x1xf32> to vector<32x128xf32>
    %18 = arith.subf %14, %17 : vector<32x128xf32>
    %19 = math.exp %18 : vector<32x128xf32>
    %cst_12 = arith.constant dense<0.000000e+00> : vector<32xf32>
    %20 = vector.multi_reduction <add>, %19, %cst_12 [1] : vector<32x128xf32> to vector<32xf32>
    %21 = vector.shape_cast %20 : vector<32xf32> to vector<32x1xf32>
    %22 = vector.broadcast %21 : vector<32x1xf32> to vector<32x128xf32>
    %23 = arith.divf %19, %22 : vector<32x128xf32>
    %c0_13 = arith.constant 0 : index
    %c0_14 = arith.constant 0 : index
    %24 = vector.load %arg6[%c0_13, %c0_14] : memref<32x128xf32, #tpu.memory_space<vmem>>, vector<32x128xf32>
    tpu.vector_store %arg6[%c0_13, %c0_14], %23 {strides = array<i32>} : memref<32x128xf32, #tpu.memory_space<vmem>>, vector<32x128xf32>,
    return
  }
  func.func @transform_0(%arg0: i32) -> (i32, i32) {
    %c0_i32 = arith.constant 0 : i32
    %c0_i32_0 = arith.constant 0 : i32
    return %arg0, %c0_i32 : i32, i32
  }
  func.func @transform_1(%arg0: i32) -> (i32, i32) {
    %c0_i32 = arith.constant 0 : i32
    %c0_i32_0 = arith.constant 0 : i32
    %c0_i32_1 = arith.constant 0 : i32
    return %c0_i32, %c0_i32_0 : i32, i32
  }
  func.func @transform_2(%arg0: i32) -> (i32, i32) {
    %c0_i32 = arith.constant 0 : i32
    %c0_i32_0 = arith.constant 0 : i32
    %c0_i32_1 = arith.constant 0 : i32
    return %c0_i32, %c0_i32_0 : i32, i32
  }
  func.func @transform_3(%arg0: i32) -> (i32, i32) {
    %c0_i32 = arith.constant 0 : i32
    %c0_i32_0 = arith.constant 0 : i32
    %c0_i32_1 = arith.constant 0 : i32
    return %c0_i32, %c0_i32_0 : i32, i32
  }
  func.func @transform_4(%arg0: i32) -> (i32, i32) {
    %c0_i32 = arith.constant 0 : i32
    %c0_i32_0 = arith.constant 0 : i32
    %c0_i32_1 = arith.constant 0 : i32
    return %c0_i32, %c0_i32_0 : i32, i32
  }
  func.func @transform_5(%arg0: i32) -> (i32, i32) {
    %c0_i32 = arith.constant 0 : i32
    %c0_i32_0 = arith.constant 0 : i32
    return %arg0, %c0_i32 : i32, i32
  }
}

</mosaic_0001>

<llo_original>
// kernel: policy_network_forward.1
$region0: #{policy_network_forward.1}
  #allocation0 [shape = 'u32[]', space=smem, size = 0x4, offset = 0x4, fixed_abs, tag = 'smem constant byte address 0x4 - core index']
  #allocation1 [shape = 'u32[144,128]{1,0:T(1,128)}', space=vmem, size = 0x12000, scoped, tag = 'internal scratch']
  %s0 = inlined_call_operand.vmem [shape: f32[64,16], index: 0, kind: input, shape index: {}]
  %s1 = inlined_call_operand.vmem [shape: bf16[16,128], index: 1, kind: input, shape index: {}]
  %s2 = inlined_call_operand.vmem [shape: f32[1,128], index: 2, kind: input, shape index: {}]
  %s3 = inlined_call_operand.vmem [shape: bf16[128,128], index: 3, kind: input, shape index: {}]
  %s4 = inlined_call_operand.vmem [shape: f32[1,128], index: 4, kind: input, shape index: {}]
  %s5 = inlined_call_operand.vmem [shape: f32[64,128], index: 5, kind: output, shape index: {}]
  %s6 = sld [smem:[#allocation0]]
  $region53: #{policy_network_forward.1} parent=0
    _
  %s8 = ssub.s32 1, %s6
  %s9 = scalar_select 0, %s8, %s6
  loop: start=0, step=1, limit=4
  $region2: #{policy_network_forward.1} parent=0 // loop_pre_header
    _
  $region3: #{policy_network_forward.1} parent=0 // loop_header
    %s11 = sphi 0, %s15
    %p12 = scmp.ge.s32.totalorder %s11, 4
    %s21 = sphi 0, %s23
    %s24 = sphi 0, %s21
    %s25 = sphi 0, %s24
    %s41 = sphi 0, %s25
    %s45 = sphi 0, %s45
    %s47 = sphi 0, %s45
    %s48 = sphi 0, %s47
    %s62 = sphi 0, %s48
    %s66 = sphi 0, %s66
    %s68 = sphi 0, %s66
    %s69 = sphi 0, %s68
    %s83 = sphi 0, %s69
    %s87 = sphi 0, %s87
    %s89 = sphi 0, %s87
    %s90 = sphi 0, %s89
    %s104 = sphi 0, %s90
    %s108 = sphi 0, %s108
    %s110 = sphi 0, %s108
    %s111 = sphi 0, %s110
    %s125 = sphi 0, %s111
    %s131 = sphi 0, %s133
    %s134 = sphi 0, %s131
    %s135 = sphi 0, %s134
    %s151 = sphi 0, %s135
  $region4: #{policy_network_forward.1} parent=0 // loop_header_branch
    %14 = sbr.rel (%p12) target = $region8
  $region5: #{policy_network_forward.1} parent=0 // loop_body
    %s16 = ssub.s32 %s11, 1
    %s17 = ssub.s32 %s11, 2
    %s18 = sadd.s32 %s11, 1
    %s19 = ssub.s32 %s11, %s18
    %p20 = scmp.eq.s32.totalorder %s19, 0
    %s22 = sadd.s32 %s21, 1
    %s23 = scalar_select %p20, %s21, %s22
    %p26 = pneg %p20
    %p27 = scmp.eq.s32.totalorder %s11, 1
    %p28 = por %p26, %p27
    %p29 = scmp.ne.s32.totalorder %s21, %s24
    %p30 = scmp.eq.s32.totalorder %s11, 0
    %p31 = por %p29, %p30
    %p32 = scmp.ne.s32.totalorder %s21, %s24
    %p33 = scmp.eq.s32.totalorder %s16, 1
    %p34 = por %p32, %p33
    %p35 = scmp.ne.s32.totalorder %s24, %s25
    %p36 = scmp.eq.s32.totalorder %s16, 0
    %p37 = por %p35, %p36
    %p38 = scmp.ne.s32.totalorder %s24, %s25
    %p39 = scmp.eq.s32.totalorder %s17, 1
    %p40 = por %p38, %p39
    %p42 = scmp.ne.s32.totalorder %s25, %s41
    %p43 = scmp.eq.s32.totalorder %s17, 0
    %p44 = por %p42, %p43
    %s46 = sadd.s32 %s45, 1
    %p49 = scmp.eq.s32.totalorder %s11, 1
    %p50 = scmp.ne.s32.totalorder %s45, %s47
    %p51 = scmp.eq.s32.totalorder %s11, 0
    %p52 = por %p50, %p51
    %p53 = scmp.ne.s32.totalorder %s45, %s47
    %p54 = scmp.eq.s32.totalorder %s16, 1
    %p55 = por %p53, %p54
    %p56 = scmp.ne.s32.totalorder %s47, %s48
    %p57 = scmp.eq.s32.totalorder %s16, 0
    %p58 = por %p56, %p57
    %p59 = scmp.ne.s32.totalorder %s47, %s48
    %p60 = scmp.eq.s32.totalorder %s17, 1
    %p61 = por %p59, %p60
    %p63 = scmp.ne.s32.totalorder %s48, %s62
    %p64 = scmp.eq.s32.totalorder %s17, 0
    %p65 = por %p63, %p64
    %s67 = sadd.s32 %s66, 1
    %p70 = scmp.eq.s32.totalorder %s11, 1
    %p71 = scmp.ne.s32.totalorder %s66, %s68
    %p72 = scmp.eq.s32.totalorder %s11, 0
    %p73 = por %p71, %p72
    %p74 = scmp.ne.s32.totalorder %s66, %s68
    %p75 = scmp.eq.s32.totalorder %s16, 1
    %p76 = por %p74, %p75
    %p77 = scmp.ne.s32.totalorder %s68, %s69
    %p78 = scmp.eq.s32.totalorder %s16, 0
    %p79 = por %p77, %p78
    %p80 = scmp.ne.s32.totalorder %s68, %s69
    %p81 = scmp.eq.s32.totalorder %s17, 1
    %p82 = por %p80, %p81
    %p84 = scmp.ne.s32.totalorder %s69, %s83
    %p85 = scmp.eq.s32.totalorder %s17, 0
    %p86 = por %p84, %p85
    %s88 = sadd.s32 %s87, 1
    %p91 = scmp.eq.s32.totalorder %s11, 1
    %p92 = scmp.ne.s32.totalorder %s87, %s89
    %p93 = scmp.eq.s32.totalorder %s11, 0
    %p94 = por %p92, %p93
    %p95 = scmp.ne.s32.totalorder %s87, %s89
    %p96 = scmp.eq.s32.totalorder %s16, 1
    %p97 = por %p95, %p96
    %p98 = scmp.ne.s32.totalorder %s89, %s90
    %p99 = scmp.eq.s32.totalorder %s16, 0
    %p100 = por %p98, %p99
    %p101 = scmp.ne.s32.totalorder %s89, %s90
    %p102 = scmp.eq.s32.totalorder %s17, 1
    %p103 = por %p101, %p102
    %p105 = scmp.ne.s32.totalorder %s90, %s104
    %p106 = scmp.eq.s32.totalorder %s17, 0
    %p107 = por %p105, %p106
    %s109 = sadd.s32 %s108, 1
    %p112 = scmp.eq.s32.totalorder %s11, 1
    %p113 = scmp.ne.s32.totalorder %s108, %s110
    %p114 = scmp.eq.s32.totalorder %s11, 0
    %p115 = por %p113, %p114
    %p116 = scmp.ne.s32.totalorder %s108, %s110
    %p117 = scmp.eq.s32.totalorder %s16, 1
    %p118 = por %p116, %p117
    %p119 = scmp.ne.s32.totalorder %s110, %s111
    %p120 = scmp.eq.s32.totalorder %s16, 0
    %p121 = por %p119, %p120
    %p122 = scmp.ne.s32.totalorder %s110, %s111
    %p123 = scmp.eq.s32.totalorder %s17, 1
    %p124 = por %p122, %p123
    %p126 = scmp.ne.s32.totalorder %s111, %s125
    %p127 = scmp.eq.s32.totalorder %s17, 0
    %p128 = por %p126, %p127
    %s129 = ssub.s32 %s11, %s18
    %p130 = scmp.eq.s32.totalorder %s129, 0
    %s132 = sadd.s32 %s131, 1
    %s133 = scalar_select %p130, %s131, %s132
    %p136 = pneg %p130
    %p137 = scmp.eq.s32.totalorder %s11, 1
    %p138 = por %p136, %p137
    %p139 = scmp.ne.s32.totalorder %s131, %s134
    %p140 = scmp.eq.s32.totalorder %s11, 0
    %p141 = por %p139, %p140
    %p142 = scmp.ne.s32.totalorder %s131, %s134
    %p143 = scmp.eq.s32.totalorder %s16, 1
    %p144 = por %p142, %p143
    %p145 = scmp.ne.s32.totalorder %s134, %s135
    %p146 = scmp.eq.s32.totalorder %s16, 0
    %p147 = por %p145, %p146
    %p148 = scmp.ne.s32.totalorder %s134, %s135
    %p149 = scmp.eq.s32.totalorder %s17, 1
    %p150 = por %p148, %p149
    %p152 = scmp.ne.s32.totalorder %s135, %s151
    %p153 = scmp.eq.s32.totalorder %s17, 0
    %p154 = por %p152, %p153
    %p155 = scmp.le.s32.totalorder 1, %s11
    %p156 = scmp.lt.s32.totalorder %s11, 3
    %p157 = pnand %p155, %p156
    %p158 = pneg %p157
    // Predicated region
    $region9: #{policy_network_forward.1} parent=5 // pred_check
      _
    $region10: #{policy_network_forward.1} parent=5 // pred_check_branch
      %160 = sbr.rel (%p157) target = $region12
    $region11: #{policy_network_forward.1} parent=5 // pred_region
      %s161 = ssub.s32 %s11, 1
      // Predicated region
      $region13: #{policy_network_forward.1} parent=11 // pred_check
        %p162 = pneg %p58
      $region14: #{policy_network_forward.1} parent=11 // pred_check_branch
        %164 = sbr.rel (%p162) target = $region16
      $region15: #{policy_network_forward.1} parent=11 // pred_region
        _
      $region16: #{policy_network_forward.1} parent=11 // pred_fallthru
        _
      // Predicated region
      $region17: #{policy_network_forward.1} parent=11 // pred_check
        %p165 = pneg %p79
      $region18: #{policy_network_forward.1} parent=11 // pred_check_branch
        %167 = sbr.rel (%p165) target = $region20
      $region19: #{policy_network_forward.1} parent=11 // pred_region
        _
      $region20: #{policy_network_forward.1} parent=11 // pred_fallthru
        _
      // Predicated region
      $region21: #{policy_network_forward.1} parent=11 // pred_check
        %p168 = pneg %p100
      $region22: #{policy_network_forward.1} parent=11 // pred_check_branch
        %170 = sbr.rel (%p168) target = $region24
      $region23: #{policy_network_forward.1} parent=11 // pred_region
        _
      $region24: #{policy_network_forward.1} parent=11 // pred_fallthru
        _
      // Predicated region
      $region25: #{policy_network_forward.1} parent=11 // pred_check
        %p171 = pneg %p121
      $region26: #{policy_network_forward.1} parent=11 // pred_check_branch
        %173 = sbr.rel (%p171) target = $region28
      $region27: #{policy_network_forward.1} parent=11 // pred_region
        _
      $region28: #{policy_network_forward.1} parent=11 // pred_fallthru
        _
    $region12: #{policy_network_forward.1} parent=5 // pred_fallthru
      _
    %p174 = scmp.lt.s32.totalorder %s11, 2
    // Predicated region
    $region29: #{policy_network_forward.1} parent=5 // pred_check
      %p175 = pneg %p174
    $region30: #{policy_network_forward.1} parent=5 // pred_check_branch
      %177 = sbr.rel (%p175) target = $region32
    $region31: #{policy_network_forward.1} parent=5 // pred_region
      // Predicated region
      $region33: #{policy_network_forward.1} parent=31 // pred_check
        %p178 = pneg %p31
      $region34: #{policy_network_forward.1} parent=31 // pred_check_branch
        %180 = sbr.rel (%p178) target = $region36
      $region35: #{policy_network_forward.1} parent=31 // pred_region
        %s181 = smul.u32 4, %s11
        %p182 = scmp.lt.s32.totalorder %s181, 7
        %s183 = scalar_select %p182, %s181, 7
        %s184 = smul.addr %s183, 8
        %s185 = scalar_lea.vmem %s0, %s184
        %s186 = smul.u32 4, %s11
      $region36: #{policy_network_forward.1} parent=31 // pred_fallthru
        _
    $region32: #{policy_network_forward.1} parent=5 // pred_fallthru
      _
    %p187 = scmp.le.s32.totalorder 1, %s11
    %p188 = scmp.lt.s32.totalorder %s11, 3
    %p189 = pnand %p187, %p188
    %p190 = pneg %p189
    // Predicated region
    $region37: #{policy_network_forward.1} parent=5 // pred_check
      _
    $region38: #{policy_network_forward.1} parent=5 // pred_check_branch
      %192 = sbr.rel (%p189) target = $region40
    $region39: #{policy_network_forward.1} parent=5 // pred_region
      %s193 = ssub.s32 %s11, 1
      %s194 = smul.u32 4, %s16
      %p195 = scmp.lt.s32.totalorder %s194, 7
      %s196 = scalar_select %p195, %s194, 7
      %s197 = smul.addr %s196, 8
      %s198 = scalar_lea.vmem %s0, %s197
      %p199 = pneg %p37
      %p200 = pneg %p34
      %p201 = pneg %p58
      %p202 = pneg %p55
      %p203 = pneg %p79
      %p204 = pneg %p76
      %p205 = pneg %p100
      %p206 = pneg %p97
      %p207 = pneg %p121
      %p208 = pneg %p118
      %p209 = pneg %p147
      %p210 = pneg %p144
      %s211 = smul.u32 4, %s16
      %p212 = scmp.lt.s32.totalorder %s211, 7
      %s213 = scalar_select %p212, %s211, 7
      %s214 = smul.addr %s213, 8
      %s215 = scalar_lea.vmem %s5, %s214
      %s216 = smul.u32 4, %s16
      %p217 = scmp.lt.s32.totalorder %s216, 7
      %s218 = scalar_select %p217, %s216, 7
      %s219 = smul.addr %s218, 8
      %s220 = scalar_lea.vmem %s0, %s219
      %s221 = smul.u32 4, %s16
      %s222 = smul.u32 4, %s16
      %p223 = scmp.lt.s32.totalorder %s222, 7
      %s224 = scalar_select %p223, %s222, 7
      %s225 = smul.addr %s224, 8
      %s226 = scalar_lea.vmem %s5, %s225
      %s227 = smul.u32 4, %s16
      %v229 = vld [vmem:[%s220] sm:$0xff]
      %v230 = vld [vmem:[%s220 + $0x8] sm:$0xff]
      %v231 = vld [vmem:[%s220 + $0x10] sm:$0xff]
      %v232 = vld [vmem:[%s220 + $0x18] sm:$0xff]
      %v233 = vpack.c.bf16 %v230, %v229
      %v234 = vpack.c.bf16 %v232, %v231
      %v235 = vld [vmem:[%s1] sm:$0xf]
      %v236 = vld [vmem:[%s1 + $0x4] sm:$0xf]
      %v237 = vld [vmem:[%s2] sm:$0x1]
      %v239 = vlaneseq
      %v240 = vshrl.u32 %v239, 7
      %v241 = vsub.s32 0, %v240
      %v242 = vrot.slane %v237, %v241
      %v246 = vunpack.c.l.b16 %v235
      %v247 = vunpack.c.l.b16 %v236
      %v248 = vpack.c.b16 %v247, %v246
      %vm250 = vcmask 130048
      %v252 = vsel %vm250, %v233, 0
      %v255 = vsel %vm250, %v234, 0
      %257 = vmatprep.subr.bf16.mxu0 0
      %258 = vmatpush1.bf16.msra.mxu0 0
      %259 = vmatprep.subr.bf16.mxu0 0
      %260 = vmatpush1.bf16.msra.mxu0 0
      %261 = vmatprep.subr.bf16.mxu0 0
      %262 = vmatpush1.bf16.msra.mxu0 0
      %263 = vmatprep.subr.bf16.mxu0 0
      %264 = vmatpush1.bf16.msra.mxu0 0
      %265 = vmatprep.subr.bf16.mxu0 0
      %266 = vmatpush1.bf16.msra.mxu0 0
      %267 = vmatprep.subr.bf16.mxu0 0
      %268 = vmatpush1.bf16.msra.mxu0 0
      %269 = vmatprep.subr.bf16.mxu0 0
      %270 = vmatpush1.bf16.msra.mxu0 0
      %271 = vmatprep.subr.bf16.mxu0 0
      %272 = vmatpush1.bf16.msra.mxu0 %v248
      %273 = vmatprep.subr.bf16.mxu0 0
      %274 = vmatpush2.bf16.msra.mxu0 0
      %275 = vmatprep.subr.bf16.mxu0 0
      %276 = vmatpush2.bf16.msra.mxu0 0
      %277 = vmatprep.subr.bf16.mxu0 0
      %278 = vmatpush2.bf16.msra.mxu0 0
      %279 = vmatprep.subr.bf16.mxu0 0
      %280 = vmatpush2.bf16.msra.mxu0 0
      %281 = vmatprep.subr.bf16.mxu0 0
      %282 = vmatpush2.bf16.msra.mxu0 0
      %283 = vmatprep.subr.bf16.mxu0 0
      %284 = vmatpush2.bf16.msra.mxu0 0
      %285 = vmatprep.subr.bf16.mxu0 0
      %286 = vmatpush2.bf16.msra.mxu0 0
      %287 = vmatprep.subr.bf16.mxu0 0
      %288 = vmatpush2.bf16.msra.mxu0 0
      %289 = vmatprep.mubr.bf16.mxu0 0
      %290 = vmatmul.mubr.bf16.gmra.mxu0 %v252
      %v291 = vpop.f32.mrf.mxu0
      %v292 = vadd.f32 %v242, %v291
      %v293 = vpop.f32.mrf.mxu0
      %v294 = vpop.f32.mrf.mxu0
      %v295 = vadd.f32 %v242, %v294
      %v296 = vpop.f32.mrf.mxu0
      %297 = vmatprep.mubr.bf16.mxu0 0
      %298 = vmatmul.mubr.bf16.gmra.mxu0 %v255
      %v299 = vpop.f32.mrf.mxu0
      %v300 = vadd.f32 %v242, %v299
      %v301 = vpop.f32.mrf.mxu0
      %v302 = vpop.f32.mrf.mxu0
      %v303 = vadd.f32 %v242, %v302
      %v304 = vpop.f32.mrf.mxu0
      %305 = vdwg.mxu0
      %v306 = vmax.f32 %v292, 0.0
      %v307 = vmax.f32 %v295, 0.0
      %v308 = vmax.f32 %v300, 0.0
      %v309 = vmax.f32 %v303, 0.0
      %v310 = vpack.c.bf16 %v307, %v306
      %v311 = vpack.c.bf16 %v309, %v308
      %v312 = vld [vmem:[%s3] sm:$0xf]
      %v313 = vld [vmem:[%s3 + $0x4] sm:$0xf]
      %v314 = vld [vmem:[%s3 + $0x8] sm:$0xf]
      %v315 = vld [vmem:[%s3 + $0xc] sm:$0xf]
      %v316 = vld [vmem:[%s3 + $0x10] sm:$0xf]
      %v317 = vld [vmem:[%s3 + $0x14] sm:$0xf]
      %v318 = vld [vmem:[%s3 + $0x18] sm:$0xf]
      %v319 = vld [vmem:[%s3 + $0x1c] sm:$0xf]
      %v320 = vld [vmem:[%s3 + $0x20] sm:$0xf]
      %v321 = vld [vmem:[%s3 + $0x24] sm:$0xf]
      %v322 = vld [vmem:[%s3 + $0x28] sm:$0xf]
      %v323 = vld [vmem:[%s3 + $0x2c] sm:$0xf]
      %v324 = vld [vmem:[%s3 + $0x30] sm:$0xf]
      %v325 = vld [vmem:[%s3 + $0x34] sm:$0xf]
      %v326 = vld [vmem:[%s3 + $0x38] sm:$0xf]
      %v327 = vld [vmem:[%s3 + $0x3c] sm:$0xf]
      %v328 = vld [vmem:[%s4] sm:$0x1]
      %v330 = vlaneseq
      %v331 = vshrl.u32 %v330, 7
      %v332 = vsub.s32 0, %v331
      %v333 = vrot.slane %v328, %v332
      %v351 = vunpack.c.l.b16 %v312
      %v352 = vunpack.c.l.b16 %v313
      %v353 = vunpack.c.l.b16 %v314
      %v354 = vunpack.c.l.b16 %v315
      %v355 = vunpack.c.l.b16 %v316
      %v356 = vunpack.c.l.b16 %v317
      %v357 = vunpack.c.l.b16 %v318
      %v358 = vunpack.c.l.b16 %v319
      %v359 = vunpack.c.l.b16 %v320
      %v360 = vunpack.c.l.b16 %v321
      %v361 = vunpack.c.l.b16 %v322
      %v362 = vunpack.c.l.b16 %v323
      %v363 = vunpack.c.l.b16 %v324
      %v364 = vunpack.c.l.b16 %v325
      %v365 = vunpack.c.l.b16 %v326
      %v366 = vunpack.c.l.b16 %v327
      %v367 = vpack.c.b16 %v352, %v351
      %v368 = vpack.c.b16 %v354, %v353
      %v369 = vpack.c.b16 %v356, %v355
      %v370 = vpack.c.b16 %v358, %v357
      %v371 = vpack.c.b16 %v360, %v359
      %v372 = vpack.c.b16 %v362, %v361
      %v373 = vpack.c.b16 %v364, %v363
      %v374 = vpack.c.b16 %v366, %v365
      %383 = vmatprep.subr.bf16.mxu0 0
      %384 = vmatpush1.bf16.msra.mxu0 %v374
      %385 = vmatprep.subr.bf16.mxu0 0
      %386 = vmatpush1.bf16.msra.mxu0 %v373
      %387 = vmatprep.subr.bf16.mxu0 0
      %388 = vmatpush1.bf16.msra.mxu0 %v372
      %389 = vmatprep.subr.bf16.mxu0 0
      %390 = vmatpush1.bf16.msra.mxu0 %v371
      %391 = vmatprep.subr.bf16.mxu0 0
      %392 = vmatpush1.bf16.msra.mxu0 %v370
      %393 = vmatprep.subr.bf16.mxu0 0
      %394 = vmatpush1.bf16.msra.mxu0 %v369
      %395 = vmatprep.subr.bf16.mxu0 0
      %396 = vmatpush1.bf16.msra.mxu0 %v368
      %397 = vmatprep.subr.bf16.mxu0 0
      %398 = vmatpush1.bf16.msra.mxu0 %v367
      %399 = vmatprep.subr.bf16.mxu0 0
      %400 = vmatpush2.bf16.msra.mxu0 0
      %401 = vmatprep.subr.bf16.mxu0 0
      %402 = vmatpush2.bf16.msra.mxu0 0
      %403 = vmatprep.subr.bf16.mxu0 0
      %404 = vmatpush2.bf16.msra.mxu0 0
      %405 = vmatprep.subr.bf16.mxu0 0
      %406 = vmatpush2.bf16.msra.mxu0 0
      %407 = vmatprep.subr.bf16.mxu0 0
      %408 = vmatpush2.bf16.msra.mxu0 0
      %409 = vmatprep.subr.bf16.mxu0 0
      %410 = vmatpush2.bf16.msra.mxu0 0
      %411 = vmatprep.subr.bf16.mxu0 0
      %412 = vmatpush2.bf16.msra.mxu0 0
      %413 = vmatprep.subr.bf16.mxu0 0
      %414 = vmatpush2.bf16.msra.mxu0 0
      %415 = vmatprep.mubr.bf16.mxu0 0
      %416 = vmatmul.mubr.bf16.gmra.mxu0 %v310
      %v417 = vpop.f32.mrf.mxu0
      %v418 = vadd.f32 %v333, %v417
      %v419 = vpop.f32.mrf.mxu0
      %v420 = vpop.f32.mrf.mxu0
      %v421 = vadd.f32 %v333, %v420
      %v422 = vpop.f32.mrf.mxu0
      %423 = vmatprep.mubr.bf16.mxu0 0
      %424 = vmatmul.mubr.bf16.gmra.mxu0 %v311
      %v425 = vpop.f32.mrf.mxu0
      %v426 = vadd.f32 %v333, %v425
      %v427 = vpop.f32.mrf.mxu0
      %v428 = vpop.f32.mrf.mxu0
      %v429 = vadd.f32 %v333, %v428
      %v430 = vpop.f32.mrf.mxu0
      %431 = vdwg.mxu0
      %432 = vmax.xlane.f32.xlu0 %v418
      %v433 = vpop.xlane.xlu0 %432
      %434 = vmax.xlane.f32.xlu0 %v421
      %v435 = vpop.xlane.xlu0 %434
      %436 = vmax.xlane.f32.xlu0 %v426
      %v437 = vpop.xlane.xlu0 %436
      %438 = vmax.xlane.f32.xlu0 %v429
      %v439 = vpop.xlane.xlu0 %438
      %v440 = vsub.f32 %v418, %v433
      %v441 = vsub.f32 %v421, %v435
      %v442 = vsub.f32 %v426, %v437
      %v443 = vsub.f32 %v429, %v439
      %v444 = vmul.f32 %v440, 1.442695
      %v445 = vpow.pop %v444
      %v446 = vmul.f32 %v441, 1.442695
      %v447 = vpow.pop %v446
      %v448 = vmul.f32 %v442, 1.442695
      %v449 = vpow.pop %v448
      %v450 = vmul.f32 %v443, 1.442695
      %v451 = vpow.pop %v450
      %452 = vadd.xlane.f32.xlu0 %v445
      %v453 = vpop.xlane.xlu0 %452
      %454 = vadd.xlane.f32.xlu0 %v447
      %v455 = vpop.xlane.xlu0 %454
      %456 = vadd.xlane.f32.xlu0 %v449
      %v457 = vpop.xlane.xlu0 %456
      %458 = vadd.xlane.f32.xlu0 %v451
      %v459 = vpop.xlane.xlu0 %458
      %v460 = vrcp.pop %v453
      %v461 = vmul.f32 %v445, %v460
      %v462 = vrcp.pop %v455
      %v463 = vmul.f32 %v447, %v462
      %v464 = vrcp.pop %v457
      %v465 = vmul.f32 %v449, %v464
      %v466 = vrcp.pop %v459
      %v467 = vmul.f32 %v451, %v466
      %468 = vst [vmem:[%s226] sm:$0xff] %v461
      %469 = vst [vmem:[%s226 + $0x8] sm:$0xff] %v463
      %470 = vst [vmem:[%s226 + $0x10] sm:$0xff] %v465
      %471 = vst [vmem:[%s226 + $0x18] sm:$0xff] %v467
      %s472 = smul.u32 4, %s16
      %p473 = scmp.lt.s32.totalorder %s472, 7
      %s474 = scalar_select %p473, %s472, 7
      %s475 = smul.addr %s474, 8
      %s476 = scalar_lea.vmem %s5, %s475
      // Predicated region
      $region41: #{policy_network_forward.1} parent=39 // pred_check
        %p477 = pneg %p144
      $region42: #{policy_network_forward.1} parent=39 // pred_check_branch
        %479 = sbr.rel (%p477) target = $region44
      $region43: #{policy_network_forward.1} parent=39 // pred_region
        %s480 = smul.u32 4, %s16
      $region44: #{policy_network_forward.1} parent=39 // pred_fallthru
        _
    $region40: #{policy_network_forward.1} parent=5 // pred_fallthru
      _
    %p481 = scmp.le.s32.totalorder 2, %s11
    // Predicated region
    $region45: #{policy_network_forward.1} parent=5 // pred_check
      %p482 = pneg %p481
    $region46: #{policy_network_forward.1} parent=5 // pred_check_branch
      %484 = sbr.rel (%p482) target = $region48
    $region47: #{policy_network_forward.1} parent=5 // pred_region
      %s485 = ssub.s32 %s11, 2
      // Predicated region
      $region49: #{policy_network_forward.1} parent=47 // pred_check
        %p486 = pneg %p150
      $region50: #{policy_network_forward.1} parent=47 // pred_check_branch
        %488 = sbr.rel (%p486) target = $region52
      $region51: #{policy_network_forward.1} parent=47 // pred_region
        %s489 = smul.u32 4, %s17
        %p490 = scmp.lt.s32.totalorder %s489, 7
        %s491 = scalar_select %p490, %s489, 7
        %s492 = smul.addr %s491, 8
        %s493 = scalar_lea.vmem %s5, %s492
      $region52: #{policy_network_forward.1} parent=47 // pred_fallthru
        _
    $region48: #{policy_network_forward.1} parent=5 // pred_fallthru
      _
  $region6: #{policy_network_forward.1} parent=0 // loop_footer
    %s15 = sadd.s32 1, %s11
  $region7: #{policy_network_forward.1} parent=0 // loop_footer_branch
    %10 = sbr.rel target = $region3
  $region8: #{policy_network_forward.1} parent=0 // loop_exit
    _

</llo_original>
